<compile_context>
chip_gen: v7x
topology: tpu7x:2x2x1
jax: 0.10.0
libtpu: 0.0.40
codegen_flags: <defaults>
</compile_context>

<pallas_src>
import math

import jax
import jax.numpy as jnp
from jax import lax
from jax.experimental import pallas as pl
from jax.experimental.pallas import tpu as pltpu


def _pick_row_tile(s: int) -> int:
    """Prefer 256 / 128 row tiles; otherwise the largest multiple-of-8 divisor of s
    (<= 256); fall back to s only for tiny / awkward sequence lengths."""
    for cand in (256, 128):
        if s % cand == 0:
            return cand
    best = 0
    t = 8
    while t <= min(s, 256):
        if s % t == 0:
            best = t
        t += 8
    return best if best > 0 else s


def _compiler_params(dims, buffer_bytes: int) -> pltpu.CompilerParams:
    """dimension_semantics + an explicit VMEM limit sized to the real buffer budget."""
    try:
        cap = int(pltpu.get_tpu_info().vmem_capacity_bytes)
    except Exception:
        cap = 64 << 20  # v7x physical VMEM — the smallest across supported chips
    limit = max(int(buffer_bytes * 1.5) + (8 << 20), 32 << 20)
    return pltpu.CompilerParams(dimension_semantics=dims,
                                vmem_limit_bytes=min(limit, cap))


# ---------------------------------------------------------------------------
# Pass 1: fused K/V projection  kv = [x @ Wk^T + bk | x @ Wv^T + bv]  (bfloat16)
# ---------------------------------------------------------------------------
def _kv_proj_kernel(x_ref, wkv_ref, bkv_ref, kv_ref):
    x = x_ref[0]                                                     # (tile, D) bf16
    kv = lax.dot_general(x, wkv_ref[...], (((1,), (1,)), ((), ())),  # contraction K = D
                         preferred_element_type=jnp.float32) + bkv_ref[...]
    kv_ref[0] = kv.astype(kv_ref.dtype)


# ---------------------------------------------------------------------------
# Pass 2: attention + fused output projection per (batch, query tile)
# ---------------------------------------------------------------------------
def _make_attention_kernel(d_model: int, n_heads: int, aw_dtype):
    d_k = d_model // n_heads
    inv_h = 1.0 / n_heads

    def kernel(xq_ref, kv_ref, wq_ref, bq_ref, wo_ref, bo_ref, out_ref, aw_ref, q_sc):
        # Fused full-width Q projection; the 1/sqrt(d_k) scale is already folded into
        # wq / bq in the wrapper.
        xq = xq_ref[0]                                               # (tq, D) bf16
        q = lax.dot_general(xq, wq_ref[...], (((1,), (1,)), ((), ())),
                            preferred_element_type=jnp.float32) + bq_ref[...]
        q_sc[...] = q.astype(jnp.bfloat16)                           # lane-dense (tq, D) store

        # Per-head scores/softmax/context.  Static loop: projections are already fused
        # full-width matmuls, so per-head live values are small (the (tq, S) score block
        # is consumed within each iteration).
        # TODO(synk): for n_heads >= 8 switch to lax.fori_loop + a (tq, D) ctx scratch
        #             to bound live ranges of the unrolled body.
        ctx_parts = []
        for h in range(n_heads):
            q_h = q_sc[:, h * d_k:(h + 1) * d_k]                     # (tq, d_k) bf16
            k_h = kv_ref[0, :, h * d_k:(h + 1) * d_k]                # (S,  d_k) bf16
            v_h = kv_ref[0, :, d_model + h * d_k:d_model + (h + 1) * d_k]

            # scores = q_h @ k_h^T — transpose folded into the MXU operand feed.
            s = lax.dot_general(q_h, k_h, (((1,), (1,)), ((), ())),
                                preferred_element_type=jnp.float32)  # (tq, S) f32
            s = s - jnp.max(s, axis=-1, keepdims=True)
            p = jnp.exp(s)
            # Approx (EUP) reciprocal: returned attention rows sum to ~1 (±~2^-12 rel).
            p = p * pl.reciprocal(jnp.sum(p, axis=-1, keepdims=True), approx=True)

            # Mean over heads (1/n_heads folded), accumulated in the output block.
            contrib = p * inv_h
            if h == 0:
                aw_ref[0] = contrib.astype(aw_dtype)
            else:
                aw_ref[0] = (aw_ref[0].astype(jnp.float32) + contrib).astype(aw_dtype)

            ctx_parts.append(jnp.dot(p.astype(jnp.bfloat16), v_h,
                                     preferred_element_type=jnp.float32
                                     ).astype(jnp.bfloat16))         # (tq, d_k)

        # Lane-dense (tq, D) context operand (no masked sub-128 column stores), then a
        # single fused output projection with contraction K = D.
        ctx = jnp.concatenate(ctx_parts, axis=-1)                    # (tq, D) bf16
        out = lax.dot_general(ctx, wo_ref[...], (((1,), (1,)), ((), ())),
                              preferred_element_type=jnp.float32) + bo_ref[...]
        out_ref[0] = out.astype(out_ref.dtype)

    return kernel


def multi_head_attention(x, params, n_heads: int, attn_weights_dtype=jnp.float32):
    """x: (B, S, D) float32.  params: nn.Linear-style weights (D_out, D_in) / biases (D,).

    Returns (output, mean_attention_weights) matching the PyTorch module's forward()
    return value and its `self.attention_weights` (eval mode, mask=None)."""
    B, S, D = x.shape
    assert D % n_heads == 0
    d_k = D // n_heads
    scale = 1.0 / math.sqrt(d_k)

    # ---- one-time wrapper-side prep: bf16 operands, scale folded, fused KV weights ----
    x_bf = x.astype(jnp.bfloat16)
    wq = (params["wq"] * scale).astype(jnp.bfloat16)                 # (D, D), nn.Linear layout
    bq = (params["bq"] * scale).reshape(1, D).astype(jnp.float32)
    wkv = jnp.concatenate([params["wk"], params["wv"]], axis=0).astype(jnp.bfloat16)  # (2D, D)
    bkv = jnp.concatenate([params["bk"], params["bv"]], axis=0).reshape(1, 2 * D).astype(jnp.float32)
    wo = params["wo"].astype(jnp.bfloat16)                           # (D, D), untransposed
    bo = params["bo"].reshape(1, D).astype(jnp.float32)

    tq = _pick_row_tile(S)
    n_qt = S // tq

    # -------- pass 1: K/V projection, grid (B, S // tq), both axes parallel --------
    kv_buf_bytes = (2 * tq * D * 2            # x row tile (double-buffered, bf16)
                    + 2 * D * D * 2           # wkv (single-buffered)
                    + 2 * D * 4               # bkv
                    + 2 * tq * 2 * D * 2)     # kv output tile (double-buffered)
    kv = pl.pallas_call(
        _kv_proj_kernel,
        out_shape=jax.ShapeDtypeStruct((B, S, 2 * D), jnp.bfloat16),
        grid_spec=pltpu.PrefetchScalarGridSpec(
            num_scalar_prefetch=0,
            grid=(B, n_qt),
            in_specs=[
                pl.BlockSpec((1, tq, D), lambda b, t: (b, t, 0)),
                pl.BlockSpec((2 * D, D), lambda b, t: (0, 0), pipeline_mode=pl.Buffered(1)),
                pl.BlockSpec((1, 2 * D), lambda b, t: (0, 0), pipeline_mode=pl.Buffered(1)),
            ],
            out_specs=pl.BlockSpec((1, tq, 2 * D), lambda b, t: (b, t, 0)),
        ),
        compiler_params=_compiler_params(("parallel", "parallel"), kv_buf_bytes),
    )(x_bf, wkv, bkv)

    # -------- pass 2: attention + output projection, grid (B, S // tq) --------
    aw_itemsize = jnp.dtype(attn_weights_dtype).itemsize
    attn_buf_bytes = (2 * tq * D * 2          # query tile (double-buffered, bf16)
                      + S * 2 * D * 2         # KV rows (single-buffered, resident per b)
                      + 2 * D * D * 2         # wq + wo (single-buffered)
                      + 2 * D * 4             # bq + bo
                      + tq * D * 2            # q scratch
                      + 2 * tq * D * 4        # output tile (double-buffered, f32)
                      + 2 * tq * S * aw_itemsize)  # attention-weights tile (double-buffered)
    kernel = _make_attention_kernel(D, n_heads, attn_weights_dtype)
    out, attn_w = pl.pallas_call(
        kernel,
        out_shape=(
            jax.ShapeDtypeStruct((B, S, D), jnp.float32),
            jax.ShapeDtypeStruct((B, S, S), attn_weights_dtype),
        ),
        grid_spec=pltpu.PrefetchScalarGridSpec(
            num_scalar_prefetch=0,
            grid=(B, n_qt),
            in_specs=[
                pl.BlockSpec((1, tq, D), lambda b, qt: (b, qt, 0)),               # x query tile
                pl.BlockSpec((1, S, 2 * D), lambda b, qt: (b, 0, 0),              # KV rows
                             pipeline_mode=pl.Buffered(1)),
                pl.BlockSpec((D, D), lambda b, qt: (0, 0), pipeline_mode=pl.Buffered(1)),  # wq
                pl.BlockSpec((1, D), lambda b, qt: (0, 0), pipeline_mode=pl.Buffered(1)),  # bq
                pl.BlockSpec((D, D), lambda b, qt: (0, 0), pipeline_mode=pl.Buffered(1)),  # wo
                pl.BlockSpec((1, D), lambda b, qt: (0, 0), pipeline_mode=pl.Buffered(1)),  # bo
            ],
            out_specs=[
                pl.BlockSpec((1, tq, D), lambda b, qt: (b, qt, 0)),   # output
                pl.BlockSpec((1, tq, S), lambda b, qt: (b, qt, 0)),   # mean attention weights
            ],
            scratch_shapes=[pltpu.VMEM((tq, D), jnp.bfloat16)],        # projected Q tile
        ),
        compiler_params=_compiler_params(("parallel", "parallel"), attn_buf_bytes),
    )(x_bf, kv, wq, bq, wo, bo)

    return out, attn_w


def _reference_mha(x, params, n_heads):
    """Pure-JAX f32 reference matching the PyTorch forward (eval mode, mask=None)."""
    B, S, D = x.shape
    d_k = D // n_heads

    def lin(x, w, b):
        return x @ w.T + b

    q = lin(x, params["wq"], params["bq"]).reshape(B, S, n_heads, d_k).transpose(0, 2, 1, 3)
    k = lin(x, params["wk"], params["bk"]).reshape(B, S, n_heads, d_k).transpose(0, 2, 1, 3)
    v = lin(x, params["wv"], params["bv"]).reshape(B, S, n_heads, d_k).transpose(0, 2, 1, 3)
    scores = jnp.einsum("bhqd,bhkd->bhqk", q, k) / math.sqrt(d_k)
    attn = jax.nn.softmax(scores, axis=-1)
    attn_mean = attn.mean(axis=1)
    ctx = jnp.einsum("bhqk,bhkd->bhqd", attn, v)
    ctx = ctx.transpose(0, 2, 1, 3).reshape(B, S, D)
    return lin(ctx, params["wo"], params["bo"]), attn_mean


if __name__ == "__main__":
    B, S, D, H = 2, 8, 32, 4

    key = jax.random.PRNGKey(0)
    keys = jax.random.split(key, 10)
    x = jax.random.normal(keys[0], (B, S, D), dtype=jnp.float32)

    # Deterministic synthetic parameters (nn.Linear shapes: weight (out, in), bias (out,)).
    params = {
        "wq": 0.05 * jax.random.normal(keys[1], (D, D), dtype=jnp.float32),
        "bq": 0.05 * jax.random.normal(keys[2], (D,), dtype=jnp.float32),
        "wk": 0.05 * jax.random.normal(keys[3], (D, D), dtype=jnp.float32),
        "bk": 0.05 * jax.random.normal(keys[4], (D,), dtype=jnp.float32),
        "wv": 0.05 * jax.random.normal(keys[5], (D, D), dtype=jnp.float32),
        "bv": 0.05 * jax.random.normal(keys[6], (D,), dtype=jnp.float32),
        "wo": 0.05 * jax.random.normal(keys[7], (D, D), dtype=jnp.float32),
        "bo": 0.05 * jax.random.normal(keys[8], (D,), dtype=jnp.float32),
    }

    out, attn_w = multi_head_attention(x, params, n_heads=H)
    jax.block_until_ready(out)
    jax.block_until_ready(attn_w)

    ref_out, ref_attn = _reference_mha(x, params, H)
    # Tolerance accounts for bf16 matmul operands (accumulation stays f32) and the
    # EUP approximate reciprocal in the softmax normalization.
    assert jnp.allclose(out, ref_out, atol=2e-2, rtol=2e-2), "output mismatch"
    assert jnp.allclose(attn_w, ref_attn, atol=2e-2, rtol=2e-2), "attention-weights mismatch"

    print("KERNEL_OK")
</pallas_src>

<mosaic_0001>
module attributes {stable_mosaic.version = 11 : i64} {
  func.func @_kv_proj_kernel(%arg0: i32, %arg1: i32, %arg2: memref<1x8x32xbf16, #tpu.memory_space<vmem>>, %arg3: memref<64x32xbf16, #tpu.memory_space<vmem>>, %arg4: memref<1x64xf32, #tpu.memory_space<vmem>>, %arg5: memref<1x8x64xbf16, #tpu.memory_space<vmem>>) attributes {dimension_semantics = [#tpu.dimension_semantics<parallel>, #tpu.dimension_semantics<parallel>], iteration_bounds = array<i64: 2, 1>, scalar_prefetch = 0 : i64, scratch_operands = 0 : i64, tpu.core_type = #tpu.core_type<tc>, window_params = [{transform_indices = @transform_0, window_bounds = array<i64: 1, 8, 32>}, {pipeline_mode = #tpu.pipeline_mode<synchronous>, transform_indices = @transform_1, window_bounds = array<i64: 64, 32>}, {pipeline_mode = #tpu.pipeline_mode<synchronous>, transform_indices = @transform_2, window_bounds = array<i64: 1, 64>}, {transform_indices = @transform_3, window_bounds = array<i64: 1, 8, 64>}]} {
    %c0 = arith.constant 0 : index
    %c0_0 = arith.constant 0 : index
    %c0_1 = arith.constant 0 : index
    %0 = vector.load %arg2[%c0, %c0_0, %c0_1] : memref<1x8x32xbf16, #tpu.memory_space<vmem>>, vector<1x8x32xbf16>
    %1 = vector.shape_cast %0 : vector<1x8x32xbf16> to vector<8x32xbf16>
    %c0_2 = arith.constant 0 : index
    %c0_3 = arith.constant 0 : index
    %2 = vector.load %arg3[%c0_2, %c0_3] : memref<64x32xbf16, #tpu.memory_space<vmem>>, vector<64x32xbf16>
    %cst = arith.constant dense<0.000000e+00> : vector<8x64xf32>
    %3 = tpu.matmul %1, %2, %cst {dimension_numbers = #tpu.dot_dimension_numbers<[1], [1], [0], [0], [0, 0, 1, 0], [], []>} : vector<8x32xbf16>, vector<64x32xbf16>, vector<8x64xf32> -> vector<8x64xf32>
    %c0_4 = arith.constant 0 : index
    %c0_5 = arith.constant 0 : index
    %4 = vector.load %arg4[%c0_4, %c0_5] : memref<1x64xf32, #tpu.memory_space<vmem>>, vector<1x64xf32>
    %5 = vector.broadcast %4 : vector<1x64xf32> to vector<8x64xf32>
    %6 = arith.addf %3, %5 : vector<8x64xf32>
    %7 = arith.truncf %6 : vector<8x64xf32> to vector<8x64xbf16>
    %c0_6 = arith.constant 0 : index
    %c0_7 = arith.constant 0 : index
    %c0_8 = arith.constant 0 : index
    %8 = vector.load %arg5[%c0_6, %c0_7, %c0_8] : memref<1x8x64xbf16, #tpu.memory_space<vmem>>, vector<1x8x64xbf16>
    %9 = vector.shape_cast %8 : vector<1x8x64xbf16> to vector<8x64xbf16>
    %10 = vector.shape_cast %7 : vector<8x64xbf16> to vector<1x8x64xbf16>
    tpu.vector_store %arg5[%c0_6, %c0_7, %c0_8], %10 {strides = array<i32>} : memref<1x8x64xbf16, #tpu.memory_space<vmem>>, vector<1x8x64xbf16>,
    return
  }
  func.func @transform_0(%arg0: i32, %arg1: i32) -> (i32, i32, i32) {
    %c0_i32 = arith.constant 0 : i32
    %c0_i32_0 = arith.constant 0 : i32
    return %arg0, %arg1, %c0_i32 : i32, i32, i32
  }
  func.func @transform_1(%arg0: i32, %arg1: i32) -> (i32, i32) {
    %c0_i32 = arith.constant 0 : i32
    %c0_i32_0 = arith.constant 0 : i32
    %c0_i32_1 = arith.constant 0 : i32
    return %c0_i32, %c0_i32_0 : i32, i32
  }
  func.func @transform_2(%arg0: i32, %arg1: i32) -> (i32, i32) {
    %c0_i32 = arith.constant 0 : i32
    %c0_i32_0 = arith.constant 0 : i32
    %c0_i32_1 = arith.constant 0 : i32
    return %c0_i32, %c0_i32_0 : i32, i32
  }
  func.func @transform_3(%arg0: i32, %arg1: i32) -> (i32, i32, i32) {
    %c0_i32 = arith.constant 0 : i32
    %c0_i32_0 = arith.constant 0 : i32
    return %arg0, %arg1, %c0_i32 : i32, i32, i32
  }
}

</mosaic_0001>

<llo_original>
// kernel: tpu_custom_call.1
$region0: #{tpu_custom_call.1}
  #allocation0 [shape = 'u32[]', space=smem, size = 0x4, offset = 0x4, fixed_abs, tag = 'smem constant byte address 0x4 - core index']
  #allocation1 [shape = 'u32[144,128]{1,0:T(1,128)}', space=vmem, size = 0x12000, scoped, tag = 'internal scratch']
  %s0 = inlined_call_operand.vmem [shape: bf16[2,8,32], index: 0, kind: input, shape index: {}]
  %s1 = inlined_call_operand.vmem [shape: bf16[64,32], index: 1, kind: input, shape index: {}]
  %s2 = inlined_call_operand.vmem [shape: f32[1,64], index: 2, kind: input, shape index: {}]
  %s3 = inlined_call_operand.hbm [shape: bf16[2,8,64], index: 3, kind: output, shape index: {}]
  %s4 = sld [smem:[#allocation0]]
  $region45: #{tpu_custom_call.1} parent=0
    _
  %s6 = ssub.s32 1, %s4
  %s7 = scalar_select 0, %s6, %s4
  $region1: #{tpu_custom_call.1} parent=0
    #allocation2 [shape = 'u8[4096]{0}', space=vmem, size = 0x1000, scoped, tag = 'output window, operand 0']
    #allocation3 [shape = 's32[2]{0}', space=sflag, size = 0x8, scoped, tag = 'scoped memory for tpu_custom_call.1']
    %8 = vsyncpa [#allocation3], 0
    %s9 = scalar_lea.sflag [#allocation3], 1
    %10 = vsyncpa %s9, 0
    loop: start=0, step=1, limit=4
    $region2: #{tpu_custom_call.1} parent=1 // loop_pre_header
      _
    $region3: #{tpu_custom_call.1} parent=1 // loop_header
      %s12 = sphi 0, %s16
      %p13 = scmp.ge.s32.totalorder %s12, 4
      %s19 = sphi 0, %s31
      %s20 = sphi 0, %s27
      %s21 = sphi 0, %s19
      %s22 = sphi 0, %s20
      %s23 = sphi 0, %s21
      %s24 = sphi 0, %s22
      %s36 = sphi 0, %s38
      %s39 = sphi 0, %s36
      %s40 = sphi 0, %s39
      %s56 = sphi 0, %s40
      %s60 = sphi 0, %s60
      %s62 = sphi 0, %s60
      %s63 = sphi 0, %s62
      %s77 = sphi 0, %s63
      %s81 = sphi 0, %s81
      %s83 = sphi 0, %s81
      %s84 = sphi 0, %s83
      %s98 = sphi 0, %s84
      %s106 = sphi 0, %s108
      %s109 = sphi 0, %s106
      %s110 = sphi 0, %s109
      %s126 = sphi 0, %s110
    $region4: #{tpu_custom_call.1} parent=1 // loop_header_branch
      %15 = sbr.rel (%p13) target = $region8
    $region5: #{tpu_custom_call.1} parent=1 // loop_body
      %s17 = ssub.s32 %s12, 1
      %s18 = ssub.s32 %s12, 2
      %s25 = sadd.s32 1, %s20
      %p26 = scmp.ge.s32.totalorder %s25, 1
      %s27 = scalar_select %p26, 0, %s25
      %s28 = sadd.s32 1, %s19
      %s29 = scalar_select %p26, %s28, %s19
      %p30 = scmp.ge.s32.totalorder %s29, 2
      %s31 = scalar_select %p30, 0, %s29
      %s32 = ssub.s32 %s19, %s31
      %s33 = ssub.s32 %s20, %s27
      %s34 = sor.u32 %s32, %s33
      %p35 = scmp.eq.s32.totalorder %s34, 0
      %s37 = sadd.s32 %s36, 1
      %s38 = scalar_select %p35, %s36, %s37
      %p41 = pneg %p35
      %p42 = scmp.eq.s32.totalorder %s12, 1
      %p43 = por %p41, %p42
      %p44 = scmp.ne.s32.totalorder %s36, %s39
      %p45 = scmp.eq.s32.totalorder %s12, 0
      %p46 = por %p44, %p45
      %p47 = scmp.ne.s32.totalorder %s36, %s39
      %p48 = scmp.eq.s32.totalorder %s17, 1
      %p49 = por %p47, %p48
      %p50 = scmp.ne.s32.totalorder %s39, %s40
      %p51 = scmp.eq.s32.totalorder %s17, 0
      %p52 = por %p50, %p51
      %p53 = scmp.ne.s32.totalorder %s39, %s40
      %p54 = scmp.eq.s32.totalorder %s18, 1
      %p55 = por %p53, %p54
      %p57 = scmp.ne.s32.totalorder %s40, %s56
      %p58 = scmp.eq.s32.totalorder %s18, 0
      %p59 = por %p57, %p58
      %s61 = sadd.s32 %s60, 1
      %p64 = scmp.eq.s32.totalorder %s12, 1
      %p65 = scmp.ne.s32.totalorder %s60, %s62
      %p66 = scmp.eq.s32.totalorder %s12, 0
      %p67 = por %p65, %p66
      %p68 = scmp.ne.s32.totalorder %s60, %s62
      %p69 = scmp.eq.s32.totalorder %s17, 1
      %p70 = por %p68, %p69
      %p71 = scmp.ne.s32.totalorder %s62, %s63
      %p72 = scmp.eq.s32.totalorder %s17, 0
      %p73 = por %p71, %p72
      %p74 = scmp.ne.s32.totalorder %s62, %s63
      %p75 = scmp.eq.s32.totalorder %s18, 1
      %p76 = por %p74, %p75
      %p78 = scmp.ne.s32.totalorder %s63, %s77
      %p79 = scmp.eq.s32.totalorder %s18, 0
      %p80 = por %p78, %p79
      %s82 = sadd.s32 %s81, 1
      %p85 = scmp.eq.s32.totalorder %s12, 1
      %p86 = scmp.ne.s32.totalorder %s81, %s83
      %p87 = scmp.eq.s32.totalorder %s12, 0
      %p88 = por %p86, %p87
      %p89 = scmp.ne.s32.totalorder %s81, %s83
      %p90 = scmp.eq.s32.totalorder %s17, 1
      %p91 = por %p89, %p90
      %p92 = scmp.ne.s32.totalorder %s83, %s84
      %p93 = scmp.eq.s32.totalorder %s17, 0
      %p94 = por %p92, %p93
      %p95 = scmp.ne.s32.totalorder %s83, %s84
      %p96 = scmp.eq.s32.totalorder %s18, 1
      %p97 = por %p95, %p96
      %p99 = scmp.ne.s32.totalorder %s84, %s98
      %p100 = scmp.eq.s32.totalorder %s18, 0
      %p101 = por %p99, %p100
      %s102 = ssub.s32 %s19, %s31
      %s103 = ssub.s32 %s20, %s27
      %s104 = sor.u32 %s102, %s103
      %p105 = scmp.eq.s32.totalorder %s104, 0
      %s107 = sadd.s32 %s106, 1
      %s108 = scalar_select %p105, %s106, %s107
      %p111 = pneg %p105
      %p112 = scmp.eq.s32.totalorder %s12, 1
      %p113 = por %p111, %p112
      %p114 = scmp.ne.s32.totalorder %s106, %s109
      %p115 = scmp.eq.s32.totalorder %s12, 0
      %p116 = por %p114, %p115
      %p117 = scmp.ne.s32.totalorder %s106, %s109
      %p118 = scmp.eq.s32.totalorder %s17, 1
      %p119 = por %p117, %p118
      %p120 = scmp.ne.s32.totalorder %s109, %s110
      %p121 = scmp.eq.s32.totalorder %s17, 0
      %p122 = por %p120, %p121
      %p123 = scmp.ne.s32.totalorder %s109, %s110
      %p124 = scmp.eq.s32.totalorder %s18, 1
      %p125 = por %p123, %p124
      %p127 = scmp.ne.s32.totalorder %s110, %s126
      %p128 = scmp.eq.s32.totalorder %s18, 0
      %p129 = por %p127, %p128
      %p130 = scmp.le.s32.totalorder 1, %s12
      %p131 = scmp.lt.s32.totalorder %s12, 3
      %p132 = pnand %p130, %p131
      %p133 = pneg %p132
      // Predicated region
      $region9: #{tpu_custom_call.1} parent=5 // pred_check
        _
      $region10: #{tpu_custom_call.1} parent=5 // pred_check_branch
        %135 = sbr.rel (%p132) target = $region12
      $region11: #{tpu_custom_call.1} parent=5 // pred_region
        %s136 = ssub.s32 %s12, 1
        // Predicated region
        $region13: #{tpu_custom_call.1} parent=11 // pred_check
          %p137 = pneg %p73
        $region14: #{tpu_custom_call.1} parent=11 // pred_check_branch
          %139 = sbr.rel (%p137) target = $region16
        $region15: #{tpu_custom_call.1} parent=11 // pred_region
          _
        $region16: #{tpu_custom_call.1} parent=11 // pred_fallthru
          _
        // Predicated region
        $region17: #{tpu_custom_call.1} parent=11 // pred_check
          %p140 = pneg %p94
        $region18: #{tpu_custom_call.1} parent=11 // pred_check_branch
          %142 = sbr.rel (%p140) target = $region20
        $region19: #{tpu_custom_call.1} parent=11 // pred_region
          _
        $region20: #{tpu_custom_call.1} parent=11 // pred_fallthru
          _
      $region12: #{tpu_custom_call.1} parent=5 // pred_fallthru
        _
      %p143 = scmp.lt.s32.totalorder %s12, 2
      // Predicated region
      $region21: #{tpu_custom_call.1} parent=5 // pred_check
        %p144 = pneg %p143
      $region22: #{tpu_custom_call.1} parent=5 // pred_check_branch
        %146 = sbr.rel (%p144) target = $region24
      $region23: #{tpu_custom_call.1} parent=5 // pred_region
        // Predicated region
        $region25: #{tpu_custom_call.1} parent=23 // pred_check
          %p147 = pneg %p46
        $region26: #{tpu_custom_call.1} parent=23 // pred_check_branch
          %149 = sbr.rel (%p147) target = $region28
        $region27: #{tpu_custom_call.1} parent=23 // pred_region
          %p150 = scmp.lt.s32.totalorder %s19, 1
          %s151 = scalar_select %p150, %s19, 1
          %p152 = scmp.lt.s32.totalorder %s20, 0
          %s153 = scalar_select %p152, %s20, 0
          %s154 = sadd.s32 %s153, %s151
          %s155 = smul.addr %s154, 4
          %s156 = scalar_lea.vmem %s0, %s155
        $region28: #{tpu_custom_call.1} parent=23 // pred_fallthru
          _
      $region24: #{tpu_custom_call.1} parent=5 // pred_fallthru
        _
      %p157 = scmp.le.s32.totalorder 1, %s12
      %p158 = scmp.lt.s32.totalorder %s12, 3
      %p159 = pnand %p157, %p158
      %p160 = pneg %p159
      // Predicated region
      $region29: #{tpu_custom_call.1} parent=5 // pred_check
        _
      $region30: #{tpu_custom_call.1} parent=5 // pred_check_branch
        %162 = sbr.rel (%p159) target = $region32
      $region31: #{tpu_custom_call.1} parent=5 // pred_region
        %s163 = ssub.s32 %s12, 1
        %p164 = scmp.lt.s32.totalorder %s21, 1
        %s165 = scalar_select %p164, %s21, 1
        %p166 = scmp.lt.s32.totalorder %s22, 0
        %s167 = scalar_select %p166, %s22, 0
        %s168 = sadd.s32 %s167, %s165
        %s169 = smul.addr %s168, 4
        %s170 = scalar_lea.vmem %s0, %s169
        %p171 = pneg %p52
        %p172 = pneg %p49
        %p173 = pneg %p73
        %p174 = pneg %p70
        %p175 = pneg %p94
        %p176 = pneg %p91
        %p177 = pneg %p122
        %p178 = pneg %p119
        %s179 = sand.u32 %s109, 1
        %s180 = scalar_lea.sflag [#allocation3], %s179
        %s181 = sand.u32 %s109, 1
        %s182 = smul.addr %s181, 4
        %s183 = scalar_lea.vmem [#allocation2], %s182
        %p184 = scmp.lt.s32.totalorder %s21, 1
        %s185 = scalar_select %p184, %s21, 1
        %p186 = scmp.lt.s32.totalorder %s22, 0
        %s187 = scalar_select %p186, %s22, 0
        %s188 = sadd.s32 %s187, %s185
        %s189 = smul.addr %s188, 4
        %s190 = scalar_lea.vmem %s0, %s189
        %v192 = vld [vmem:[%s190] sm:$0xf]
        %v193 = vld [vmem:[%s1] sm:$0xf]
        %v194 = vld [vmem:[%s1 + $0x4] sm:$0xf]
        %v195 = vld [vmem:[%s1 + $0x8] sm:$0xf]
        %v196 = vld [vmem:[%s1 + $0xc] sm:$0xf]
        %v197 = vld [vmem:[%s1 + $0x10] sm:$0xf]
        %v198 = vld [vmem:[%s1 + $0x14] sm:$0xf]
        %v199 = vld [vmem:[%s1 + $0x18] sm:$0xf]
        %v200 = vld [vmem:[%s1 + $0x1c] sm:$0xf]
        %v201 = vld [vmem:[%s2] sm:$0x1]
        %v203 = vlaneseq
        %v204 = vshrl.u32 %v203, 7
        %v205 = vsub.s32 0, %v204
        %v206 = vrot.slane %v201, %v205
        %v216 = vunpack.c.l.b16 %v193
        %v217 = vunpack.c.l.b16 %v194
        %v218 = vunpack.c.l.b16 %v195
        %v219 = vunpack.c.l.b16 %v196
        %v220 = vunpack.c.l.b16 %v197
        %v221 = vunpack.c.l.b16 %v198
        %v222 = vunpack.c.l.b16 %v199
        %v223 = vunpack.c.l.b16 %v200
        %v224 = vpack.c.b16 %v217, %v216
        %v225 = vpack.c.b16 %v219, %v218
        %v226 = vpack.c.b16 %v221, %v220
        %v227 = vpack.c.b16 %v223, %v222
        %vm228 = vcmask 261120
        %v230 = vsel %vm228, %v192, 0
        %v233 = vsel %vm228, %v224, 0
        %v236 = vsel %vm228, %v225, 0
        %v239 = vsel %vm228, %v226, 0
        %v242 = vsel %vm228, %v227, 0
        %244 = vmatprep.subr.bf16.mxu0 0
        %245 = vmatpush1.bf16.xpose.msra.mxu0 %v233
        %246 = vmatprep.subr.bf16.mxu0 0
        %247 = vmatpush1.bf16.xpose.msra.mxu0 %v236
        %248 = vmatprep.subr.bf16.mxu0 0
        %249 = vmatpush1.bf16.xpose.msra.mxu0 %v239
        %250 = vmatprep.subr.bf16.mxu0 0
        %251 = vmatpush1.bf16.xpose.msra.mxu0 %v242
        %252 = vmatprep.subr.bf16.mxu0 0
        %253 = vmatpush1.bf16.xpose.msra.mxu0 0
        %254 = vmatprep.subr.bf16.mxu0 0
        %255 = vmatpush1.bf16.xpose.msra.mxu0 0
        %256 = vmatprep.subr.bf16.mxu0 0
        %257 = vmatpush1.bf16.xpose.msra.mxu0 0
        %258 = vmatprep.subr.bf16.mxu0 0
        %259 = vmatpush1.bf16.xpose.msra.mxu0 0
        %260 = vmatprep.subr.bf16.mxu0 0
        %261 = vmatpush1.bf16.xpose.msra.mxu0 0
        %262 = vmatprep.subr.bf16.mxu0 0
        %263 = vmatpush1.bf16.xpose.msra.mxu0 0
        %264 = vmatprep.subr.bf16.mxu0 0
        %265 = vmatpush1.bf16.xpose.msra.mxu0 0
        %266 = vmatprep.subr.bf16.mxu0 0
        %267 = vmatpush1.bf16.xpose.msra.mxu0 0
        %268 = vmatprep.subr.bf16.mxu0 0
        %269 = vmatpush1.bf16.xpose.msra.mxu0 0
        %270 = vmatprep.subr.bf16.mxu0 0
        %271 = vmatpush1.bf16.xpose.msra.mxu0 0
        %272 = vmatprep.subr.bf16.mxu0 0
        %273 = vmatpush1.bf16.xpose.msra.mxu0 0
        %274 = vmatprep.subr.bf16.mxu0 0
        %275 = vmatpush1.bf16.xpose.msra.mxu0 0
        %276 = vmatprep.mubr.bf16.mxu0 0
        %277 = vmatmul.mubr.bf16.gmra.mrb[0].mxu0 %v230
        %v278 = vpop.f32.mrb[0].mxu0
        %v279 = vadd.f32 %v206, %v278
        %v280 = vpop.f32.mrb[0].mxu0
        %v281 = vpop.f32.mrb[0].mxu0
        %v282 = vpop.f32.mrb[0].mxu0
        %283 = vdwg.mxu0
        %v284 = vpack.c.bf16 %v279, %v279
        %vm285 = vcmask 519168
        %286 = vst.msk [vmem:[%s183] sm:$0xf] %vm285, %v284
        %s287 = sand.u32 %s109, 1
        %s288 = scalar_lea.sflag [#allocation3], %s287
        %s289 = sand.u32 %s109, 1
        %s290 = smul.addr %s289, 4
        %s291 = scalar_lea.vmem [#allocation2], %s290
        // Predicated region
        $region33: #{tpu_custom_call.1} parent=31 // pred_check
          %p292 = pneg %p119
        $region34: #{tpu_custom_call.1} parent=31 // pred_check_branch
          %294 = sbr.rel (%p292) target = $region36
        $region35: #{tpu_custom_call.1} parent=31 // pred_region
          %s296 = ssub.s32 64, 64
          %297 = vsyncadd %s288, %s296
          %s298 = sadd.s32 %s22, %s21
          %s299 = smul.addr %s298, 64
          %s300 = scalar_lea.hbm %s3, %s299
          %s302 = sshll.u32 %s291, 4
          %s303 = int_to_ptr.vmem [resolvable:$true] %s302
          %305 = dma.vmem_to_hbm [thread:$0]  %s303, 64, %s300, %s288
        $region36: #{tpu_custom_call.1} parent=31 // pred_fallthru
          _
      $region32: #{tpu_custom_call.1} parent=5 // pred_fallthru
        _
      %p306 = scmp.le.s32.totalorder 2, %s12
      // Predicated region
      $region37: #{tpu_custom_call.1} parent=5 // pred_check
        %p307 = pneg %p306
      $region38: #{tpu_custom_call.1} parent=5 // pred_check_branch
        %309 = sbr.rel (%p307) target = $region40
      $region39: #{tpu_custom_call.1} parent=5 // pred_region
        %s310 = ssub.s32 %s12, 2
        // Predicated region
        $region41: #{tpu_custom_call.1} parent=39 // pred_check
          %p311 = pneg %p125
        $region42: #{tpu_custom_call.1} parent=39 // pred_check_branch
          %313 = sbr.rel (%p311) target = $region44
        $region43: #{tpu_custom_call.1} parent=39 // pred_region
          %s314 = sand.u32 %s110, 1
          %s315 = scalar_lea.sflag [#allocation3], %s314
          %s316 = sand.u32 %s110, 1
          %s317 = smul.addr %s316, 4
          %s318 = scalar_lea.vmem [#allocation2], %s317
          %319 = dma.done %s315, 64
        $region44: #{tpu_custom_call.1} parent=39 // pred_fallthru
          _
      $region40: #{tpu_custom_call.1} parent=5 // pred_fallthru
        _
    $region6: #{tpu_custom_call.1} parent=1 // loop_footer
      %s16 = sadd.s32 1, %s12
    $region7: #{tpu_custom_call.1} parent=1 // loop_footer_branch
      %11 = sbr.rel target = $region3
    $region8: #{tpu_custom_call.1} parent=1 // loop_exit
      _
    %320 = vsyncpa [#allocation3], 1
    %s321 = scalar_lea.sflag [#allocation3], 1
    %322 = vsyncpa %s321, 1

</llo_original>
